<compile_context>
chip_gen: v5e
topology: v5e:2x2
jax: 0.10.0
libtpu: 0.0.40
codegen_flags: <defaults>
</compile_context>

<pallas_src>
import jax
import jax.numpy as jnp
from jax.experimental import pallas as pl
from jax.experimental.pallas import tpu as pltpu

N_FEATURES = 32
HIDDEN = N_FEATURES // 2   # 16
OUT = 2


def _round_up(n, m):
    return ((n + m - 1) // m) * m


def mlp_kernel_t(xt_ref, w1_ref, b1_ref, w2_ref, b2_ref, o_ref):
    # xt: (32, tb) bf16, w1: (16, 32) bf16, b1: (16, 1) f32,
    # w2: (2, 16) bf16,  b2: (2, 1) f32,   o: (2, tb) f32.
    h = jnp.dot(w1_ref[...], xt_ref[...], preferred_element_type=jnp.float32)
    h = jnp.maximum(h + b1_ref[...], 0.0)               # bias + ReLU on VPU (f32)
    y = jnp.dot(w2_ref[...], h.astype(w2_ref.dtype),
                preferred_element_type=jnp.float32)
    o_ref[...] = (y + b2_ref[...]).astype(o_ref.dtype)  # lane-dense (2, tb) store


def test_mod_forward_t(x_t, w1, b1, w2, b2, *, tile_b=8192):
    """Lane-dense fused MLP.

    x_t: (32, B) bf16 (features on sublanes, batch on lanes).
    w1:  (16, 32) bf16, b1: (16, 1) f32, w2: (2, 16) bf16, b2: (2, 1) f32.
    Returns y_t: (2, B) f32 (batch on lanes).
    """
    B = x_t.shape[1]

    # Batch tile: multiple of 128 (lane-dense for bf16 input and f32 output).
    b_pad = _round_up(B, 128)
    tb = min(_round_up(tile_b, 128), b_pad)
    # v7x: prefer >= 2 grid steps so both TensorCores get batch tiles
    # (no effect on single-TC v5e/v6e).
    if b_pad // tb < 2 and b_pad >= 256 and (b_pad // 2) % 128 == 0:
        tb = b_pad // 2
    b_pad = _round_up(b_pad, tb)

    if b_pad != B:
        # Only the (tiny) lane-axis tail is padded; padded columns are sliced
        # off below.  TODO(synk): drop this copy via a masked tail store.
        x_t = jnp.pad(x_t, ((0, 0), (0, b_pad - B)))

    out = pl.pallas_call(
        mlp_kernel_t,
        out_shape=jax.ShapeDtypeStruct((OUT, b_pad), jnp.float32),
        grid_spec=pltpu.PrefetchScalarGridSpec(
            num_scalar_prefetch=0,
            grid=(b_pad // tb,),
            in_specs=[
                # x_T: tiled along the batch/lane axis -> double-buffered DMA.
                pl.BlockSpec((N_FEATURES, tb), lambda i: (0, i)),
                # Weights/biases: constant block index -> fetched once,
                # VMEM-resident across all grid steps.
                pl.BlockSpec((HIDDEN, N_FEATURES), lambda i: (0, 0)),
                pl.BlockSpec((HIDDEN, 1), lambda i: (0, 0)),
                pl.BlockSpec((OUT, HIDDEN), lambda i: (0, 0)),
                pl.BlockSpec((OUT, 1), lambda i: (0, 0)),
            ],
            out_specs=pl.BlockSpec((OUT, tb), lambda i: (0, i)),
        ),
        compiler_params=pltpu.CompilerParams(
            dimension_semantics=("parallel",),
        ),
    )(x_t, w1, b1, w2, b2)

    return out[:, :B] if b_pad != B else out


def test_mod_forward(x, w1, b1, w2, b2, **kw):
    """Module-semantics wrapper: x (B, 32) -> (B, 2).

    The transposes here are wrapper-level layout plumbing; pipelines that can
    produce/consume the lane-dense (32, B)/(2, B) layouts should call
    test_mod_forward_t directly.
    """
    x_t = jnp.transpose(x).astype(jnp.bfloat16)
    y_t = test_mod_forward_t(x_t, w1, b1, w2, b2, **kw)
    return jnp.transpose(y_t)


def init_params(key):
    # Deterministic init mimicking torch.nn.Linear defaults:
    # U(-1/sqrt(fan_in), 1/sqrt(fan_in)) for both weight and bias.
    # Weights are kept in PyTorch's native (out, in) layout, which is exactly
    # the transposed form the kernel consumes.
    k1, k2, k3, k4 = jax.random.split(key, 4)
    bound1 = 1.0 / jnp.sqrt(jnp.float32(N_FEATURES))
    bound2 = 1.0 / jnp.sqrt(jnp.float32(HIDDEN))
    w1 = jax.random.uniform(k1, (HIDDEN, N_FEATURES), jnp.float32, -bound1, bound1)
    b1 = jax.random.uniform(k2, (HIDDEN, 1), jnp.float32, -bound1, bound1)
    w2 = jax.random.uniform(k3, (OUT, HIDDEN), jnp.float32, -bound2, bound2)
    b2 = jax.random.uniform(k4, (OUT, 1), jnp.float32, -bound2, bound2)
    return w1, b1, w2, b2


if __name__ == "__main__":
    key = jax.random.PRNGKey(0)
    kx, kp = jax.random.split(key)

    # Ragged batch: exercises lane-axis padding, >1 grid step, and slicing.
    B = 1000
    x_f32 = jax.random.normal(kx, (B, N_FEATURES), jnp.float32)
    w1, b1, w2, b2 = init_params(kp)

    # bf16 for the bandwidth-dominant operand (x) and the MXU weights;
    # biases and accumulation stay f32.
    w1_bf16 = w1.astype(jnp.bfloat16)
    w2_bf16 = w2.astype(jnp.bfloat16)

    out = test_mod_forward(x_f32, w1_bf16, b1, w2_bf16, b2, tile_b=512)
    out = jax.block_until_ready(out)
    assert out.shape == (B, OUT), out.shape

    # Pure-JAX reference mirroring the kernel's bf16-matmul / f32-accumulate
    # numerics (bf16 inputs & weights, f32 accumulation, bf16 re-cast of h).
    x_bf16 = x_f32.astype(jnp.bfloat16)
    h_ref = jnp.maximum(
        jnp.dot(x_bf16, w1_bf16.T, preferred_element_type=jnp.float32)
        + b1.reshape(1, -1), 0.0)
    ref = (jnp.dot(h_ref.astype(jnp.bfloat16), w2_bf16.T,
                   preferred_element_type=jnp.float32)
           + b2.reshape(1, -1))
    assert jnp.allclose(out, ref, atol=1e-3, rtol=1e-3), "mismatch vs bf16 reference"

    # Sanity check against the full-f32 module semantics (loose tolerance,
    # accounts for bf16 input/weight rounding).
    ref_f32 = (jnp.maximum(x_f32 @ w1.T + b1.reshape(1, -1), 0.0) @ w2.T
               + b2.reshape(1, -1))
    assert jnp.allclose(out, ref_f32, atol=5e-2, rtol=5e-2), "mismatch vs f32 reference"

    print("KERNEL_OK")
</pallas_src>

<mosaic_0001>
module attributes {stable_mosaic.version = 11 : i64} {
  func.func @mlp_kernel_t(%arg0: i32, %arg1: memref<32x512xbf16, #tpu.memory_space<vmem>>, %arg2: memref<16x32xbf16, #tpu.memory_space<vmem>>, %arg3: memref<16x1xf32, #tpu.memory_space<vmem>>, %arg4: memref<2x16xbf16, #tpu.memory_space<vmem>>, %arg5: memref<2x1xf32, #tpu.memory_space<vmem>>, %arg6: memref<2x512xf32, #tpu.memory_space<vmem>>) attributes {dimension_semantics = [#tpu.dimension_semantics<parallel>], iteration_bounds = array<i64: 2>, scalar_prefetch = 0 : i64, scratch_operands = 0 : i64, tpu.core_type = #tpu.core_type<tc>, window_params = [{transform_indices = @transform_0, window_bounds = array<i64: 32, 512>}, {pipeline_mode = #tpu.pipeline_mode<synchronous>, transform_indices = @transform_1, window_bounds = array<i64: 16, 32>}, {pipeline_mode = #tpu.pipeline_mode<synchronous>, transform_indices = @transform_2, window_bounds = array<i64: 16, 1>}, {pipeline_mode = #tpu.pipeline_mode<synchronous>, transform_indices = @transform_3, window_bounds = array<i64: 2, 16>}, {pipeline_mode = #tpu.pipeline_mode<synchronous>, transform_indices = @transform_4, window_bounds = array<i64: 2, 1>}, {transform_indices = @transform_5, window_bounds = array<i64: 2, 512>}]} {
    %c0 = arith.constant 0 : index
    %c0_0 = arith.constant 0 : index
    %0 = vector.load %arg2[%c0, %c0_0] : memref<16x32xbf16, #tpu.memory_space<vmem>>, vector<16x32xbf16>
    %c0_1 = arith.constant 0 : index
    %c0_2 = arith.constant 0 : index
    %1 = vector.load %arg1[%c0_1, %c0_2] : memref<32x512xbf16, #tpu.memory_space<vmem>>, vector<32x512xbf16>
    %cst = arith.constant dense<0.000000e+00> : vector<16x512xf32>
    %2 = tpu.matmul %0, %1, %cst {dimension_numbers = #tpu.dot_dimension_numbers<[1], [0], [0], [1], [0, 0, 1, 1], [], []>} : vector<16x32xbf16>, vector<32x512xbf16>, vector<16x512xf32> -> vector<16x512xf32>
    %c0_3 = arith.constant 0 : index
    %c0_4 = arith.constant 0 : index
    %3 = vector.load %arg3[%c0_3, %c0_4] : memref<16x1xf32, #tpu.memory_space<vmem>>, vector<16x1xf32>
    %4 = vector.broadcast %3 : vector<16x1xf32> to vector<16x512xf32>
    %5 = arith.addf %2, %4 : vector<16x512xf32>
    %cst_5 = arith.constant 0.000000e+00 : f32
    %6 = vector.broadcast %cst_5 : f32 to vector<16x512xf32>
    %7 = arith.maximumf %5, %6 : vector<16x512xf32>
    %c0_6 = arith.constant 0 : index
    %c0_7 = arith.constant 0 : index
    %8 = vector.load %arg4[%c0_6, %c0_7] : memref<2x16xbf16, #tpu.memory_space<vmem>>, vector<2x16xbf16>
    %9 = arith.truncf %7 : vector<16x512xf32> to vector<16x512xbf16>
    %cst_8 = arith.constant dense<0.000000e+00> : vector<2x512xf32>
    %10 = tpu.matmul %8, %9, %cst_8 {dimension_numbers = #tpu.dot_dimension_numbers<[1], [0], [0], [1], [0, 0, 1, 1], [], []>} : vector<2x16xbf16>, vector<16x512xbf16>, vector<2x512xf32> -> vector<2x512xf32>
    %c0_9 = arith.constant 0 : index
    %c0_10 = arith.constant 0 : index
    %11 = vector.load %arg5[%c0_9, %c0_10] : memref<2x1xf32, #tpu.memory_space<vmem>>, vector<2x1xf32>
    %12 = vector.broadcast %11 : vector<2x1xf32> to vector<2x512xf32>
    %13 = arith.addf %10, %12 : vector<2x512xf32>
    %c0_11 = arith.constant 0 : index
    %c0_12 = arith.constant 0 : index
    %14 = vector.load %arg6[%c0_11, %c0_12] : memref<2x512xf32, #tpu.memory_space<vmem>>, vector<2x512xf32>
    tpu.vector_store %arg6[%c0_11, %c0_12], %13 {strides = array<i32>} : memref<2x512xf32, #tpu.memory_space<vmem>>, vector<2x512xf32>,
    return
  }
  func.func @transform_0(%arg0: i32) -> (i32, i32) {
    %c0_i32 = arith.constant 0 : i32
    %c0_i32_0 = arith.constant 0 : i32
    return %c0_i32, %arg0 : i32, i32
  }
  func.func @transform_1(%arg0: i32) -> (i32, i32) {
    %c0_i32 = arith.constant 0 : i32
    %c0_i32_0 = arith.constant 0 : i32
    %c0_i32_1 = arith.constant 0 : i32
    return %c0_i32, %c0_i32_0 : i32, i32
  }
  func.func @transform_2(%arg0: i32) -> (i32, i32) {
    %c0_i32 = arith.constant 0 : i32
    %c0_i32_0 = arith.constant 0 : i32
    %c0_i32_1 = arith.constant 0 : i32
    return %c0_i32, %c0_i32_0 : i32, i32
  }
  func.func @transform_3(%arg0: i32) -> (i32, i32) {
    %c0_i32 = arith.constant 0 : i32
    %c0_i32_0 = arith.constant 0 : i32
    %c0_i32_1 = arith.constant 0 : i32
    return %c0_i32, %c0_i32_0 : i32, i32
  }
  func.func @transform_4(%arg0: i32) -> (i32, i32) {
    %c0_i32 = arith.constant 0 : i32
    %c0_i32_0 = arith.constant 0 : i32
    %c0_i32_1 = arith.constant 0 : i32
    return %c0_i32, %c0_i32_0 : i32, i32
  }
  func.func @transform_5(%arg0: i32) -> (i32, i32) {
    %c0_i32 = arith.constant 0 : i32
    %c0_i32_0 = arith.constant 0 : i32
    return %c0_i32, %arg0 : i32, i32
  }
}

</mosaic_0001>

<llo_original>
// kernel: tpu_custom_call.1
$region0: #{tpu_custom_call.1}
  #allocation0 [shape = 'u32[]', space=smem, size = 0x4, offset = 0x4, fixed_abs, tag = 'smem constant byte address 0x4 - core index']
  #allocation1 [shape = 'u32[72,128]{1,0:T(1,128)}', space=vmem, size = 0x9000, scoped, tag = 'internal scratch']
  %s0 = inlined_call_operand.hbm [shape: bf16[32,1024], index: 0, kind: input, shape index: {}]
  %s1 = inlined_call_operand.vmem [shape: bf16[16,32], index: 1, kind: input, shape index: {}]
  %s2 = inlined_call_operand.vmem [shape: f32[16,1], index: 2, kind: input, shape index: {}]
  %s3 = inlined_call_operand.vmem [shape: bf16[2,16], index: 3, kind: input, shape index: {}]
  %s4 = inlined_call_operand.vmem [shape: f32[2,1], index: 4, kind: input, shape index: {}]
  %s5 = inlined_call_operand.hbm [shape: f32[2,1024], index: 5, kind: output, shape index: {}]
  %s6 = sld [smem:[#allocation0]]
  $region57: #{tpu_custom_call.1} parent=0
    _
  %s8 = ssub.s32 1, %s6
  %s9 = scalar_select 0, %s8, %s6
  $region1: #{tpu_custom_call.1} parent=0
    #allocation2 [shape = 'u8[65536]{0}', space=vmem, size = 0x10000, scoped, tag = 'input window, operand 0']
    #allocation3 [shape = 's32[2]{0}', space=sflag, size = 0x8, scoped, tag = 'scoped memory for tpu_custom_call.1']
    #allocation4 [shape = 's32[2]{0}', space=sflag, size = 0x8, scoped, tag = 'scoped memory for tpu_custom_call.1']
    #allocation5 [shape = 'u8[8192]{0}', space=vmem, size = 0x2000, scoped, tag = 'output window, operand 0']
    %10 = vsyncpa [#allocation3], 0
    %s11 = scalar_lea.sflag [#allocation3], 1
    %12 = vsyncpa %s11, 0
    %13 = vsyncpa [#allocation4], 0
    %s14 = scalar_lea.sflag [#allocation4], 1
    %15 = vsyncpa %s14, 0
    loop: start=0, step=1, limit=4
    $region2: #{tpu_custom_call.1} parent=1 // loop_pre_header
      _
    $region3: #{tpu_custom_call.1} parent=1 // loop_header
      %s17 = sphi 0, %s21
      %p18 = scmp.ge.s32.totalorder %s17, 4
      %s27 = sphi 0, %s29
      %s30 = sphi 0, %s27
      %s31 = sphi 0, %s30
      %s47 = sphi 0, %s31
      %s51 = sphi 0, %s51
      %s53 = sphi 0, %s51
      %s54 = sphi 0, %s53
      %s68 = sphi 0, %s54
      %s72 = sphi 0, %s72
      %s74 = sphi 0, %s72
      %s75 = sphi 0, %s74
      %s89 = sphi 0, %s75
      %s93 = sphi 0, %s93
      %s95 = sphi 0, %s93
      %s96 = sphi 0, %s95
      %s110 = sphi 0, %s96
      %s114 = sphi 0, %s114
      %s116 = sphi 0, %s114
      %s117 = sphi 0, %s116
      %s131 = sphi 0, %s117
      %s137 = sphi 0, %s139
      %s140 = sphi 0, %s137
      %s141 = sphi 0, %s140
      %s157 = sphi 0, %s141
    $region4: #{tpu_custom_call.1} parent=1 // loop_header_branch
      %20 = sbr.rel (%p18) target = $region8
    $region5: #{tpu_custom_call.1} parent=1 // loop_body
      %s22 = ssub.s32 %s17, 1
      %s23 = ssub.s32 %s17, 2
      %s24 = sadd.s32 %s17, 1
      %s25 = ssub.s32 %s17, %s24
      %p26 = scmp.eq.s32.totalorder %s25, 0
      %s28 = sadd.s32 %s27, 1
      %s29 = scalar_select %p26, %s27, %s28
      %p32 = pneg %p26
      %p33 = scmp.eq.s32.totalorder %s17, 1
      %p34 = por %p32, %p33
      %p35 = scmp.ne.s32.totalorder %s27, %s30
      %p36 = scmp.eq.s32.totalorder %s17, 0
      %p37 = por %p35, %p36
      %p38 = scmp.ne.s32.totalorder %s27, %s30
      %p39 = scmp.eq.s32.totalorder %s22, 1
      %p40 = por %p38, %p39
      %p41 = scmp.ne.s32.totalorder %s30, %s31
      %p42 = scmp.eq.s32.totalorder %s22, 0
      %p43 = por %p41, %p42
      %p44 = scmp.ne.s32.totalorder %s30, %s31
      %p45 = scmp.eq.s32.totalorder %s23, 1
      %p46 = por %p44, %p45
      %p48 = scmp.ne.s32.totalorder %s31, %s47
      %p49 = scmp.eq.s32.totalorder %s23, 0
      %p50 = por %p48, %p49
      %s52 = sadd.s32 %s51, 1
      %p55 = scmp.eq.s32.totalorder %s17, 1
      %p56 = scmp.ne.s32.totalorder %s51, %s53
      %p57 = scmp.eq.s32.totalorder %s17, 0
      %p58 = por %p56, %p57
      %p59 = scmp.ne.s32.totalorder %s51, %s53
      %p60 = scmp.eq.s32.totalorder %s22, 1
      %p61 = por %p59, %p60
      %p62 = scmp.ne.s32.totalorder %s53, %s54
      %p63 = scmp.eq.s32.totalorder %s22, 0
      %p64 = por %p62, %p63
      %p65 = scmp.ne.s32.totalorder %s53, %s54
      %p66 = scmp.eq.s32.totalorder %s23, 1
      %p67 = por %p65, %p66
      %p69 = scmp.ne.s32.totalorder %s54, %s68
      %p70 = scmp.eq.s32.totalorder %s23, 0
      %p71 = por %p69, %p70
      %s73 = sadd.s32 %s72, 1
      %p76 = scmp.eq.s32.totalorder %s17, 1
      %p77 = scmp.ne.s32.totalorder %s72, %s74
      %p78 = scmp.eq.s32.totalorder %s17, 0
      %p79 = por %p77, %p78
      %p80 = scmp.ne.s32.totalorder %s72, %s74
      %p81 = scmp.eq.s32.totalorder %s22, 1
      %p82 = por %p80, %p81
      %p83 = scmp.ne.s32.totalorder %s74, %s75
      %p84 = scmp.eq.s32.totalorder %s22, 0
      %p85 = por %p83, %p84
      %p86 = scmp.ne.s32.totalorder %s74, %s75
      %p87 = scmp.eq.s32.totalorder %s23, 1
      %p88 = por %p86, %p87
      %p90 = scmp.ne.s32.totalorder %s75, %s89
      %p91 = scmp.eq.s32.totalorder %s23, 0
      %p92 = por %p90, %p91
      %s94 = sadd.s32 %s93, 1
      %p97 = scmp.eq.s32.totalorder %s17, 1
      %p98 = scmp.ne.s32.totalorder %s93, %s95
      %p99 = scmp.eq.s32.totalorder %s17, 0
      %p100 = por %p98, %p99
      %p101 = scmp.ne.s32.totalorder %s93, %s95
      %p102 = scmp.eq.s32.totalorder %s22, 1
      %p103 = por %p101, %p102
      %p104 = scmp.ne.s32.totalorder %s95, %s96
      %p105 = scmp.eq.s32.totalorder %s22, 0
      %p106 = por %p104, %p105
      %p107 = scmp.ne.s32.totalorder %s95, %s96
      %p108 = scmp.eq.s32.totalorder %s23, 1
      %p109 = por %p107, %p108
      %p111 = scmp.ne.s32.totalorder %s96, %s110
      %p112 = scmp.eq.s32.totalorder %s23, 0
      %p113 = por %p111, %p112
      %s115 = sadd.s32 %s114, 1
      %p118 = scmp.eq.s32.totalorder %s17, 1
      %p119 = scmp.ne.s32.totalorder %s114, %s116
      %p120 = scmp.eq.s32.totalorder %s17, 0
      %p121 = por %p119, %p120
      %p122 = scmp.ne.s32.totalorder %s114, %s116
      %p123 = scmp.eq.s32.totalorder %s22, 1
      %p124 = por %p122, %p123
      %p125 = scmp.ne.s32.totalorder %s116, %s117
      %p126 = scmp.eq.s32.totalorder %s22, 0
      %p127 = por %p125, %p126
      %p128 = scmp.ne.s32.totalorder %s116, %s117
      %p129 = scmp.eq.s32.totalorder %s23, 1
      %p130 = por %p128, %p129
      %p132 = scmp.ne.s32.totalorder %s117, %s131
      %p133 = scmp.eq.s32.totalorder %s23, 0
      %p134 = por %p132, %p133
      %s135 = ssub.s32 %s17, %s24
      %p136 = scmp.eq.s32.totalorder %s135, 0
      %s138 = sadd.s32 %s137, 1
      %s139 = scalar_select %p136, %s137, %s138
      %p142 = pneg %p136
      %p143 = scmp.eq.s32.totalorder %s17, 1
      %p144 = por %p142, %p143
      %p145 = scmp.ne.s32.totalorder %s137, %s140
      %p146 = scmp.eq.s32.totalorder %s17, 0
      %p147 = por %p145, %p146
      %p148 = scmp.ne.s32.totalorder %s137, %s140
      %p149 = scmp.eq.s32.totalorder %s22, 1
      %p150 = por %p148, %p149
      %p151 = scmp.ne.s32.totalorder %s140, %s141
      %p152 = scmp.eq.s32.totalorder %s22, 0
      %p153 = por %p151, %p152
      %p154 = scmp.ne.s32.totalorder %s140, %s141
      %p155 = scmp.eq.s32.totalorder %s23, 1
      %p156 = por %p154, %p155
      %p158 = scmp.ne.s32.totalorder %s141, %s157
      %p159 = scmp.eq.s32.totalorder %s23, 0
      %p160 = por %p158, %p159
      %p161 = scmp.le.s32.totalorder 1, %s17
      %p162 = scmp.lt.s32.totalorder %s17, 3
      %p163 = pnand %p161, %p162
      %p164 = pneg %p163
      // Predicated region
      $region9: #{tpu_custom_call.1} parent=5 // pred_check
        _
      $region10: #{tpu_custom_call.1} parent=5 // pred_check_branch
        %166 = sbr.rel (%p163) target = $region12
      $region11: #{tpu_custom_call.1} parent=5 // pred_region
        %s167 = ssub.s32 %s17, 1
        // Predicated region
        $region13: #{tpu_custom_call.1} parent=11 // pred_check
          %p168 = pneg %p64
        $region14: #{tpu_custom_call.1} parent=11 // pred_check_branch
          %170 = sbr.rel (%p168) target = $region16
        $region15: #{tpu_custom_call.1} parent=11 // pred_region
          _
        $region16: #{tpu_custom_call.1} parent=11 // pred_fallthru
          _
        // Predicated region
        $region17: #{tpu_custom_call.1} parent=11 // pred_check
          %p171 = pneg %p85
        $region18: #{tpu_custom_call.1} parent=11 // pred_check_branch
          %173 = sbr.rel (%p171) target = $region20
        $region19: #{tpu_custom_call.1} parent=11 // pred_region
          _
        $region20: #{tpu_custom_call.1} parent=11 // pred_fallthru
          _
        // Predicated region
        $region21: #{tpu_custom_call.1} parent=11 // pred_check
          %p174 = pneg %p106
        $region22: #{tpu_custom_call.1} parent=11 // pred_check_branch
          %176 = sbr.rel (%p174) target = $region24
        $region23: #{tpu_custom_call.1} parent=11 // pred_region
          _
        $region24: #{tpu_custom_call.1} parent=11 // pred_fallthru
          _
        // Predicated region
        $region25: #{tpu_custom_call.1} parent=11 // pred_check
          %p177 = pneg %p127
        $region26: #{tpu_custom_call.1} parent=11 // pred_check_branch
          %179 = sbr.rel (%p177) target = $region28
        $region27: #{tpu_custom_call.1} parent=11 // pred_region
          _
        $region28: #{tpu_custom_call.1} parent=11 // pred_fallthru
          _
      $region12: #{tpu_custom_call.1} parent=5 // pred_fallthru
        _
      %p180 = scmp.lt.s32.totalorder %s17, 2
      // Predicated region
      $region29: #{tpu_custom_call.1} parent=5 // pred_check
        %p181 = pneg %p180
      $region30: #{tpu_custom_call.1} parent=5 // pred_check_branch
        %183 = sbr.rel (%p181) target = $region32
      $region31: #{tpu_custom_call.1} parent=5 // pred_region
        // Predicated region
        $region33: #{tpu_custom_call.1} parent=31 // pred_check
          %p184 = pneg %p37
        $region34: #{tpu_custom_call.1} parent=31 // pred_check_branch
          %186 = sbr.rel (%p184) target = $region36
        $region35: #{tpu_custom_call.1} parent=31 // pred_region
          %s187 = sand.u32 %s27, 1
          %s188 = scalar_lea.sflag [#allocation3], %s187
          %s189 = sand.u32 %s27, 1
          %s190 = smul.addr %s189, 64
          %s191 = scalar_lea.vmem [#allocation2], %s190
          %s192 = smul.u32 4, %s17
          %194 = vsyncadd %s188, 0
          %s195 = smul.addr %s192, 4
          %s196 = scalar_lea.hbm %s0, %s195
          %s197 = sshll.u32 %s196, 4
          %s198 = int_to_ptr.hbm [resolvable:$true] %s197
          %s199 = sshll.u32 %s191, 4
          %s200 = int_to_ptr.vmem [resolvable:$true] %s199
          %205 = dma.hbm_to_vmem [thread:$0]  %s198, 1024, %s200, %s188, 512, 256, 16
        $region36: #{tpu_custom_call.1} parent=31 // pred_fallthru
          _
      $region32: #{tpu_custom_call.1} parent=5 // pred_fallthru
        _
      %p206 = scmp.le.s32.totalorder 1, %s17
      %p207 = scmp.lt.s32.totalorder %s17, 3
      %p208 = pnand %p206, %p207
      %p209 = pneg %p208
      // Predicated region
      $region37: #{tpu_custom_call.1} parent=5 // pred_check
        _
      $region38: #{tpu_custom_call.1} parent=5 // pred_check_branch
        %211 = sbr.rel (%p208) target = $region40
      $region39: #{tpu_custom_call.1} parent=5 // pred_region
        %s212 = ssub.s32 %s17, 1
        %s213 = sand.u32 %s30, 1
        %s214 = scalar_lea.sflag [#allocation3], %s213
        %s215 = sand.u32 %s30, 1
        %s216 = smul.addr %s215, 64
        %s217 = scalar_lea.vmem [#allocation2], %s216
        // Predicated region
        $region41: #{tpu_custom_call.1} parent=39 // pred_check
          %p218 = pneg %p43
        $region42: #{tpu_custom_call.1} parent=39 // pred_check_branch
          %220 = sbr.rel (%p218) target = $region44
        $region43: #{tpu_custom_call.1} parent=39 // pred_region
          %222 = dma.done %s214, 1024
        $region44: #{tpu_custom_call.1} parent=39 // pred_fallthru
          _
        %s223 = sand.u32 %s30, 1
        %s224 = scalar_lea.sflag [#allocation3], %s223
        %s225 = sand.u32 %s30, 1
        %s226 = smul.addr %s225, 64
        %s227 = scalar_lea.vmem [#allocation2], %s226
        %p228 = pneg %p43
        %p229 = pneg %p40
        %p230 = pneg %p64
        %p231 = pneg %p61
        %p232 = pneg %p85
        %p233 = pneg %p82
        %p234 = pneg %p106
        %p235 = pneg %p103
        %p236 = pneg %p127
        %p237 = pneg %p124
        %p238 = pneg %p153
        %p239 = pneg %p150
        %s240 = sand.u32 %s140, 1
        %s241 = scalar_lea.sflag [#allocation4], %s240
        %s242 = sand.u32 %s140, 1
        %s243 = smul.addr %s242, 8
        %s244 = scalar_lea.vmem [#allocation5], %s243
        %s245 = smul.u32 4, %s22
        %s246 = smul.u32 4, %s22
        %v248 = vld [vmem:[%s1] sm:$0xf]
        %v249 = vld [vmem:[%s1 + $0x4] sm:$0xf]
        %v250 = vld [vmem:[%s217] sm:$0xff]
        %v251 = vld [vmem:[%s217 + $0x8] sm:$0xff]
        %v252 = vld [vmem:[%s217 + $0x10] sm:$0xff]
        %v253 = vld [vmem:[%s217 + $0x18] sm:$0xff]
        %v254 = vld [vmem:[%s217 + $0x20] sm:$0xff]
        %v255 = vld [vmem:[%s217 + $0x28] sm:$0xff]
        %v256 = vld [vmem:[%s217 + $0x30] sm:$0xff]
        %v257 = vld [vmem:[%s217 + $0x38] sm:$0xff]
        %v258 = vld [vmem:[%s2] sm:$0xff]
        %v259 = vld [vmem:[%s2 + $0x8] sm:$0xff]
        %261 = vset.pattern.permute.xlu0 0
        %262 = vperm.xlu0 %261, %v258
        %v263 = vpop.permute.xlu0 %262
        %266 = vset.pattern.permute.xlu0 0
        %267 = vperm.xlu0 %266, %v259
        %v268 = vpop.permute.xlu0 %267
        %v272 = vunpack.c.l.b16 %v248
        %v273 = vunpack.c.l.b16 %v249
        %v274 = vpack.c.b16 %v273, %v272
        %v283 = vunpack.c.l.b16 %v250
        %v284 = vunpack.c.h.b16 %v250
        %v285 = vunpack.c.l.b16 %v251
        %v286 = vunpack.c.h.b16 %v251
        %v287 = vunpack.c.l.b16 %v252
        %v288 = vunpack.c.h.b16 %v252
        %v289 = vunpack.c.l.b16 %v253
        %v290 = vunpack.c.h.b16 %v253
        %v291 = vunpack.c.l.b16 %v254
        %v292 = vunpack.c.h.b16 %v254
        %v293 = vunpack.c.l.b16 %v255
        %v294 = vunpack.c.h.b16 %v255
        %v295 = vunpack.c.l.b16 %v256
        %v296 = vunpack.c.h.b16 %v256
        %v297 = vunpack.c.l.b16 %v257
        %v298 = vunpack.c.h.b16 %v257
        %v299 = vpack.c.b16 %v287, %v283
        %v300 = vpack.c.b16 %v288, %v284
        %v301 = vpack.c.b16 %v289, %v285
        %v302 = vpack.c.b16 %v290, %v286
        %v303 = vpack.c.b16 %v295, %v291
        %v304 = vpack.c.b16 %v296, %v292
        %v305 = vpack.c.b16 %v297, %v293
        %v306 = vpack.c.b16 %v298, %v294
        %vm315 = vcmask 261120
        %v317 = vsel %vm315, %v274, 0
        %319 = vmatpush.bf16.msra.mxu0 0
        %320 = vmatpush.bf16.msra.mxu0 0
        %321 = vmatpush.bf16.msra.mxu0 0
        %322 = vmatpush.bf16.msra.mxu0 0
        %323 = vmatpush.bf16.msra.mxu0 0
        %324 = vmatpush.bf16.msra.mxu0 0
        %325 = vmatpush.bf16.msra.mxu0 %v303
        %326 = vmatpush.bf16.msra.mxu0 %v299
        %327 = vmatmul.bf16.gmra.mxu0 %v317
        %v328 = vpop.f32.mrf.mxu0
        %v329 = vadd.f32 %v263, %v328
        %v330 = vpop.f32.mrf.mxu0
        %v331 = vadd.f32 %v268, %v330
        %332 = vdwg.mxu0
        %333 = vmatpush.bf16.msra.mxu0 0
        %334 = vmatpush.bf16.msra.mxu0 0
        %335 = vmatpush.bf16.msra.mxu0 0
        %336 = vmatpush.bf16.msra.mxu0 0
        %337 = vmatpush.bf16.msra.mxu0 0
        %338 = vmatpush.bf16.msra.mxu0 0
        %339 = vmatpush.bf16.msra.mxu0 %v304
        %340 = vmatpush.bf16.msra.mxu0 %v300
        %341 = vmatmul.bf16.gmra.mxu0 %v317
        %v342 = vpop.f32.mrf.mxu0
        %v343 = vadd.f32 %v263, %v342
        %v344 = vpop.f32.mrf.mxu0
        %v345 = vadd.f32 %v268, %v344
        %346 = vdwg.mxu0
        %347 = vmatpush.bf16.msra.mxu0 0
        %348 = vmatpush.bf16.msra.mxu0 0
        %349 = vmatpush.bf16.msra.mxu0 0
        %350 = vmatpush.bf16.msra.mxu0 0
        %351 = vmatpush.bf16.msra.mxu0 0
        %352 = vmatpush.bf16.msra.mxu0 0
        %353 = vmatpush.bf16.msra.mxu0 %v305
        %354 = vmatpush.bf16.msra.mxu0 %v301
        %355 = vmatmul.bf16.gmra.mxu0 %v317
        %v356 = vpop.f32.mrf.mxu0
        %v357 = vadd.f32 %v263, %v356
        %v358 = vpop.f32.mrf.mxu0
        %v359 = vadd.f32 %v268, %v358
        %360 = vdwg.mxu0
        %361 = vmatpush.bf16.msra.mxu0 0
        %362 = vmatpush.bf16.msra.mxu0 0
        %363 = vmatpush.bf16.msra.mxu0 0
        %364 = vmatpush.bf16.msra.mxu0 0
        %365 = vmatpush.bf16.msra.mxu0 0
        %366 = vmatpush.bf16.msra.mxu0 0
        %367 = vmatpush.bf16.msra.mxu0 %v306
        %368 = vmatpush.bf16.msra.mxu0 %v302
        %369 = vmatmul.bf16.gmra.mxu0 %v317
        %v370 = vpop.f32.mrf.mxu0
        %v371 = vadd.f32 %v263, %v370
        %v372 = vpop.f32.mrf.mxu0
        %v373 = vadd.f32 %v268, %v372
        %374 = vdwg.mxu0
        %v375 = vmax.f32 %v329, 0.0
        %v376 = vmax.f32 %v343, 0.0
        %v377 = vmax.f32 %v357, 0.0
        %v378 = vmax.f32 %v371, 0.0
        %v379 = vmax.f32 %v331, 0.0
        %v380 = vmax.f32 %v345, 0.0
        %v381 = vmax.f32 %v359, 0.0
        %v382 = vmax.f32 %v373, 0.0
        %v383 = vld [vmem:[%s3] sm:$0x1]
        %v384 = vpack.c.bf16 %v379, %v375
        %v385 = vpack.c.bf16 %v380, %v376
        %v386 = vpack.c.bf16 %v381, %v377
        %v387 = vpack.c.bf16 %v382, %v378
        %v388 = vld [vmem:[%s4] sm:$0x3]
        %390 = vset.pattern.permute.xlu0 0
        %391 = vperm.xlu0 %390, %v388
        %v392 = vpop.permute.xlu0 %391
        %vm394 = vcmask 130048
        %v396 = vsel %vm394, %v383, 0
        %398 = vmatpush.bf16.msra.mxu0 0
        %399 = vmatpush.bf16.msra.mxu0 0
        %400 = vmatpush.bf16.msra.mxu0 0
        %401 = vmatpush.bf16.msra.mxu0 0
        %402 = vmatpush.bf16.msra.mxu0 0
        %403 = vmatpush.bf16.msra.mxu0 0
        %404 = vmatpush.bf16.msra.mxu0 0
        %405 = vmatpush.bf16.msra.mxu0 %v384
        %406 = vmatmul.bf16.gmra.mxu0 %v396
        %v407 = vpop.f32.mrf.mxu0
        %v408 = vadd.f32 %v392, %v407
        %v409 = vpop.f32.mrf.mxu0
        %410 = vdwg.mxu0
        %411 = vmatpush.bf16.msra.mxu0 0
        %412 = vmatpush.bf16.msra.mxu0 0
        %413 = vmatpush.bf16.msra.mxu0 0
        %414 = vmatpush.bf16.msra.mxu0 0
        %415 = vmatpush.bf16.msra.mxu0 0
        %416 = vmatpush.bf16.msra.mxu0 0
        %417 = vmatpush.bf16.msra.mxu0 0
        %418 = vmatpush.bf16.msra.mxu0 %v385
        %419 = vmatmul.bf16.gmra.mxu0 %v396
        %v420 = vpop.f32.mrf.mxu0
        %v421 = vadd.f32 %v392, %v420
        %v422 = vpop.f32.mrf.mxu0
        %423 = vdwg.mxu0
        %424 = vmatpush.bf16.msra.mxu0 0
        %425 = vmatpush.bf16.msra.mxu0 0
        %426 = vmatpush.bf16.msra.mxu0 0
        %427 = vmatpush.bf16.msra.mxu0 0
        %428 = vmatpush.bf16.msra.mxu0 0
        %429 = vmatpush.bf16.msra.mxu0 0
        %430 = vmatpush.bf16.msra.mxu0 0
        %431 = vmatpush.bf16.msra.mxu0 %v386
        %432 = vmatmul.bf16.gmra.mxu0 %v396
        %v433 = vpop.f32.mrf.mxu0
        %v434 = vadd.f32 %v392, %v433
        %v435 = vpop.f32.mrf.mxu0
        %436 = vdwg.mxu0
        %437 = vmatpush.bf16.msra.mxu0 0
        %438 = vmatpush.bf16.msra.mxu0 0
        %439 = vmatpush.bf16.msra.mxu0 0
        %440 = vmatpush.bf16.msra.mxu0 0
        %441 = vmatpush.bf16.msra.mxu0 0
        %442 = vmatpush.bf16.msra.mxu0 0
        %443 = vmatpush.bf16.msra.mxu0 0
        %444 = vmatpush.bf16.msra.mxu0 %v387
        %445 = vmatmul.bf16.gmra.mxu0 %v396
        %v446 = vpop.f32.mrf.mxu0
        %v447 = vadd.f32 %v392, %v446
        %v448 = vpop.f32.mrf.mxu0
        %449 = vdwg.mxu0
        %v454 = vrot.slane %v421, 6
        %v455 = vrot.slane %v434, 4
        %v456 = vrot.slane %v447, 2
        %vm457 = vcmask 1041408
        %v458 = vsel %vm457, %v408, %v454
        %vm459 = vcmask 1045508
        %v460 = vsel %vm459, %v455, %v456
        %vm461 = vcmask 1043456
        %v462 = vsel %vm461, %v458, %v460
        %464 = vst [vmem:[%s244] sm:$0xff] %v462
        %s465 = sand.u32 %s140, 1
        %s466 = scalar_lea.sflag [#allocation4], %s465
        %s467 = sand.u32 %s140, 1
        %s468 = smul.addr %s467, 8
        %s469 = scalar_lea.vmem [#allocation5], %s468
        // Predicated region
        $region45: #{tpu_custom_call.1} parent=39 // pred_check
          %p470 = pneg %p150
        $region46: #{tpu_custom_call.1} parent=39 // pred_check_branch
          %472 = sbr.rel (%p470) target = $region48
        $region47: #{tpu_custom_call.1} parent=39 // pred_region
          %s473 = smul.u32 4, %s22
          %475 = vsyncadd %s466, 0
          %s476 = smul.addr %s473, 2
          %s477 = scalar_lea.hbm %s5, %s476
          %s479 = sshll.u32 %s469, 4
          %s480 = int_to_ptr.vmem [resolvable:$true] %s479
          %s481 = sshll.u32 %s477, 4
          %s482 = int_to_ptr.hbm [resolvable:$true] %s481
          %484 = dma.vmem_to_hbm [thread:$0]  %s480, 128, %s482, %s466
        $region48: #{tpu_custom_call.1} parent=39 // pred_fallthru
          _
      $region40: #{tpu_custom_call.1} parent=5 // pred_fallthru
        _
      %p485 = scmp.le.s32.totalorder 2, %s17
      // Predicated region
      $region49: #{tpu_custom_call.1} parent=5 // pred_check
        %p486 = pneg %p485
      $region50: #{tpu_custom_call.1} parent=5 // pred_check_branch
        %488 = sbr.rel (%p486) target = $region52
      $region51: #{tpu_custom_call.1} parent=5 // pred_region
        %s489 = ssub.s32 %s17, 2
        // Predicated region
        $region53: #{tpu_custom_call.1} parent=51 // pred_check
          %p490 = pneg %p156
        $region54: #{tpu_custom_call.1} parent=51 // pred_check_branch
          %492 = sbr.rel (%p490) target = $region56
        $region55: #{tpu_custom_call.1} parent=51 // pred_region
          %s493 = sand.u32 %s141, 1
          %s494 = scalar_lea.sflag [#allocation4], %s493
          %s495 = sand.u32 %s141, 1
          %s496 = smul.addr %s495, 8
          %s497 = scalar_lea.vmem [#allocation5], %s496
          %499 = dma.done %s494, 128
        $region56: #{tpu_custom_call.1} parent=51 // pred_fallthru
          _
      $region52: #{tpu_custom_call.1} parent=5 // pred_fallthru
        _
    $region6: #{tpu_custom_call.1} parent=1 // loop_footer
      %s21 = sadd.s32 1, %s17
    $region7: #{tpu_custom_call.1} parent=1 // loop_footer_branch
      %16 = sbr.rel target = $region3
    $region8: #{tpu_custom_call.1} parent=1 // loop_exit
      _
    %500 = vsyncpa [#allocation3], 1
    %s501 = scalar_lea.sflag [#allocation3], 1
    %502 = vsyncpa %s501, 1
    %503 = vsyncpa [#allocation4], 1
    %s504 = scalar_lea.sflag [#allocation4], 1
    %505 = vsyncpa %s504, 1

</llo_original>
